<compile_context>
chip_gen: v7x
topology: tpu7x:2x2x1
jax: 0.10.0
libtpu: 0.0.40
codegen_flags: <defaults>
</compile_context>

<pallas_src>
import functools
import math

import jax
import jax.numpy as jnp
from jax import lax
from jax.experimental import pallas as pl
from jax.experimental.pallas import tpu as pltpu


def _residual_update_kernel(*refs, inv_keep, eps, use_mask, drop_all, affine):
    it = iter(refs)
    feat_ref = next(it)
    upd_ref = next(it)
    mask_ref = next(it) if use_mask else None
    gamma_ref = next(it) if affine else None
    beta_ref = next(it) if affine else None
    out_ref = next(it)

    x = feat_ref[...].astype(jnp.float32)
    u = upd_ref[...].astype(jnp.float32)

    if drop_all:                       # dropout_p >= 1.0: everything dropped
        u = jnp.zeros_like(u)
    elif use_mask:
        u = u * mask_ref[...].astype(jnp.float32) * inv_keep

    y = x + u

    # LayerNorm over the feature (lane) axis.  Single pass: both reductions are
    # independent so they can overlap on the XLU.  E[y^2]-mean^2 has a mild
    # cancellation risk in f32 -> clamp at 0 (fine for post-residual activations).
    inv_d = 1.0 / y.shape[-1]
    s1 = jnp.sum(y, axis=-1, keepdims=True)
    s2 = jnp.sum(y * y, axis=-1, keepdims=True)
    mean = s1 * inv_d
    var = jnp.maximum(s2 * inv_d - mean * mean, 0.0)
    normed = (y - mean) * lax.rsqrt(var + eps)

    if affine:
        g = gamma_ref[...].astype(jnp.float32)
        b = beta_ref[...].astype(jnp.float32)
        normed = normed * g + b

    out_ref[...] = normed.astype(out_ref.dtype)


_SUBLANE_FOR_ITEMSIZE = {4: 8, 2: 16, 1: 32}


def residual_update(feat: jax.Array,
                    update: jax.Array,
                    gamma: jax.Array | None = None,
                    beta: jax.Array | None = None,
                    *,
                    dropout_p: float = 0.0,
                    training: bool = False,
                    rng_key: jax.Array | None = None,
                    eps: float = 1e-5,
                    max_rows_per_tile: int = 1024,
                    vmem_budget_bytes: int = 32 * 1024 * 1024) -> jax.Array:
    """LayerNorm(feat + dropout(update)); feat/update: [..., D], gamma/beta: [D] or None."""
    if (gamma is None) != (beta is None):
        raise ValueError("gamma and beta must both be given or both be None")

    orig_shape = feat.shape
    D = orig_shape[-1]
    rows = math.prod(orig_shape[:-1]) if len(orig_shape) > 1 else 1

    feat2 = feat.reshape(rows, D)
    upd2 = update.reshape(rows, D)

    use_dropout = bool(training) and float(dropout_p) > 0.0
    drop_all = use_dropout and float(dropout_p) >= 1.0
    use_mask = use_dropout and not drop_all
    affine = gamma is not None

    itemsize = jnp.dtype(feat.dtype).itemsize
    sublane = _SUBLANE_FOR_ITEMSIZE.get(itemsize, 8)
    n_streams = 3 + (1 if use_mask else 0)          # feat, upd, (mask), out

    # Largest row tile that keeps the double-buffered working set under budget
    # (budget chosen so v7x's 64 MiB VMEM is never exceeded).
    bytes_per_row = 2 * n_streams * D * itemsize    # x2 for double buffering
    max_tile = max(sublane, vmem_budget_bytes // max(bytes_per_row, 1))
    max_tile = min(max_tile, max_rows_per_tile)
    if rows <= max_tile:
        tile_rows = rows                            # single tile, full extent
    else:
        tile_rows = max(sublane, (max_tile // sublane) * sublane)
    grid = (pl.cdiv(rows, tile_rows),)

    row_spec = pl.BlockSpec((tile_rows, D), lambda i: (i, 0))
    param_spec = pl.BlockSpec((1, D), lambda i: (0, 0))

    inputs = [feat2, upd2]
    in_specs = [row_spec, row_spec]

    if use_mask:
        if rng_key is None:
            rng_key = jax.random.PRNGKey(0)         # deterministic default
        keep = jax.random.bernoulli(rng_key, 1.0 - float(dropout_p), (rows, D))
        inputs.append(keep.astype(feat.dtype))
        in_specs.append(row_spec)

    if affine:
        inputs.append(gamma.reshape(1, D))
        inputs.append(beta.reshape(1, D))
        in_specs.extend([param_spec, param_spec])

    kernel = functools.partial(
        _residual_update_kernel,
        inv_keep=(1.0 / (1.0 - float(dropout_p))) if use_mask else 1.0,
        eps=float(eps),
        use_mask=use_mask,
        drop_all=drop_all,
        affine=affine,
    )

    footprint = 2 * n_streams * tile_rows * D * itemsize
    vmem_limit = int(min(64 * 1024 * 1024,
                         max(32 * 1024 * 1024, footprint + 8 * 1024 * 1024)))

    out = pl.pallas_call(
        kernel,
        out_shape=jax.ShapeDtypeStruct((rows, D), feat.dtype),
        grid=grid,
        in_specs=in_specs,
        out_specs=row_spec,
        compiler_params=pltpu.CompilerParams(
            dimension_semantics=("parallel",),       # rows are independent
            vmem_limit_bytes=vmem_limit,
        ),
    )(*inputs)

    return out.reshape(orig_shape)


def _reference(feat, update, gamma=None, beta=None, eps=1e-5):
    y = feat.astype(jnp.float32) + update.astype(jnp.float32)
    mean = jnp.mean(y, axis=-1, keepdims=True)
    var = jnp.mean((y - mean) ** 2, axis=-1, keepdims=True)
    out = (y - mean) * lax.rsqrt(var + eps)
    if gamma is not None:
        out = out * gamma + beta
    return out


if __name__ == "__main__":
    # Shapes consistent with the module: batch=2, seq=8, out_dim=32.
    B, S, D = 2, 8, 32
    key = jax.random.PRNGKey(0)
    k1, k2, k3 = jax.random.split(key, 3)
    feat = jax.random.normal(k1, (B, S, D), dtype=jnp.float32)
    update = jax.random.normal(k2, (B, S, D), dtype=jnp.float32)
    gamma = jnp.ones((D,), dtype=jnp.float32)       # PyTorch LayerNorm defaults
    beta = jnp.zeros((D,), dtype=jnp.float32)

    # 1) Eval mode (dropout inactive) with explicit affine params.
    out_eval = residual_update(feat, update, gamma, beta,
                               dropout_p=0.1, training=False)
    jax.block_until_ready(out_eval)
    ref_eval = _reference(feat, update, gamma, beta)
    assert out_eval.shape == (B, S, D)
    assert jnp.allclose(out_eval, ref_eval, atol=1e-4, rtol=1e-4), "eval mismatch"

    # 2) Eval mode with default (identity) affine params elided entirely.
    out_noaff = residual_update(feat, update, dropout_p=0.0, training=False)
    jax.block_until_ready(out_noaff)
    assert jnp.allclose(out_noaff, ref_eval, atol=1e-4, rtol=1e-4), "no-affine mismatch"

    # 3) Training mode: deterministic dropout given rng_key; rebuild the same
    #    mask for the pure-JAX reference.
    p = 0.25
    out_train = residual_update(feat, update, gamma, beta,
                                dropout_p=p, training=True, rng_key=k3)
    jax.block_until_ready(out_train)
    keep = jax.random.bernoulli(k3, 1.0 - p, (B * S, D)).astype(jnp.float32)
    keep = keep.reshape(B, S, D)
    ref_train = _reference(feat, update * keep * (1.0 / (1.0 - p)), gamma, beta)
    assert jnp.allclose(out_train, ref_train, atol=1e-4, rtol=1e-4), "train mismatch"

    # 4) Multi-tile grid with a ragged last block (no wrapper padding needed).
    kf, ku = jax.random.split(k3)
    feat_big = jax.random.normal(kf, (4, 300, 64), dtype=jnp.float32)
    upd_big = jax.random.normal(ku, (4, 300, 64), dtype=jnp.float32)
    out_big = residual_update(feat_big, upd_big, dropout_p=0.0, training=False,
                              max_rows_per_tile=512)
    jax.block_until_ready(out_big)
    ref_big = _reference(feat_big, upd_big)
    assert jnp.allclose(out_big, ref_big, atol=1e-4, rtol=1e-4), "ragged mismatch"

    print("KERNEL_OK")
</pallas_src>

<mosaic_0001>
module attributes {stable_mosaic.version = 11 : i64} {
  func.func @_residual_update_kernel(%arg0: i32, %arg1: memref<16x32xf32, #tpu.memory_space<vmem>>, %arg2: memref<16x32xf32, #tpu.memory_space<vmem>>, %arg3: memref<1x32xf32, #tpu.memory_space<vmem>>, %arg4: memref<1x32xf32, #tpu.memory_space<vmem>>, %arg5: memref<16x32xf32, #tpu.memory_space<vmem>>) attributes {dimension_semantics = [#tpu.dimension_semantics<parallel>], iteration_bounds = array<i64: 1>, scalar_prefetch = 0 : i64, scratch_operands = 0 : i64, tpu.core_type = #tpu.core_type<tc>, window_params = [{transform_indices = @transform_0, window_bounds = array<i64: 16, 32>}, {transform_indices = @transform_1, window_bounds = array<i64: 16, 32>}, {pipeline_mode = #tpu.pipeline_mode<synchronous>, transform_indices = @transform_2, window_bounds = array<i64: 1, 32>}, {pipeline_mode = #tpu.pipeline_mode<synchronous>, transform_indices = @transform_3, window_bounds = array<i64: 1, 32>}, {transform_indices = @transform_4, window_bounds = array<i64: 16, 32>}]} {
    %c0 = arith.constant 0 : index
    %c0_0 = arith.constant 0 : index
    %0 = vector.load %arg1[%c0, %c0_0] : memref<16x32xf32, #tpu.memory_space<vmem>>, vector<16x32xf32>
    %c0_1 = arith.constant 0 : index
    %c0_2 = arith.constant 0 : index
    %1 = vector.load %arg2[%c0_1, %c0_2] : memref<16x32xf32, #tpu.memory_space<vmem>>, vector<16x32xf32>
    %2 = arith.addf %0, %1 : vector<16x32xf32>
    %cst = arith.constant dense<0.000000e+00> : vector<16xf32>
    %3 = vector.multi_reduction <add>, %2, %cst [1] : vector<16x32xf32> to vector<16xf32>
    %4 = vector.shape_cast %3 : vector<16xf32> to vector<16x1xf32>
    %5 = arith.mulf %2, %2 : vector<16x32xf32>
    %cst_3 = arith.constant dense<0.000000e+00> : vector<16xf32>
    %6 = vector.multi_reduction <add>, %5, %cst_3 [1] : vector<16x32xf32> to vector<16xf32>
    %7 = vector.shape_cast %6 : vector<16xf32> to vector<16x1xf32>
    %cst_4 = arith.constant 3.125000e-02 : f32
    %8 = vector.broadcast %cst_4 : f32 to vector<16x1xf32>
    %9 = arith.mulf %4, %8 : vector<16x1xf32>
    %cst_5 = arith.constant 3.125000e-02 : f32
    %10 = vector.broadcast %cst_5 : f32 to vector<16x1xf32>
    %11 = arith.mulf %7, %10 : vector<16x1xf32>
    %12 = arith.mulf %9, %9 : vector<16x1xf32>
    %13 = arith.subf %11, %12 : vector<16x1xf32>
    %cst_6 = arith.constant 0.000000e+00 : f32
    %14 = vector.broadcast %cst_6 : f32 to vector<16x1xf32>
    %15 = arith.maximumf %13, %14 : vector<16x1xf32>
    %16 = vector.broadcast %9 : vector<16x1xf32> to vector<16x32xf32>
    %17 = arith.subf %2, %16 : vector<16x32xf32>
    %cst_7 = arith.constant 9.99999974E-6 : f32
    %18 = vector.broadcast %cst_7 : f32 to vector<16x1xf32>
    %19 = arith.addf %15, %18 : vector<16x1xf32>
    %20 = math.rsqrt %19 : vector<16x1xf32>
    %21 = vector.broadcast %20 : vector<16x1xf32> to vector<16x32xf32>
    %22 = arith.mulf %17, %21 : vector<16x32xf32>
    %c0_8 = arith.constant 0 : index
    %c0_9 = arith.constant 0 : index
    %23 = vector.load %arg3[%c0_8, %c0_9] : memref<1x32xf32, #tpu.memory_space<vmem>>, vector<1x32xf32>
    %c0_10 = arith.constant 0 : index
    %c0_11 = arith.constant 0 : index
    %24 = vector.load %arg4[%c0_10, %c0_11] : memref<1x32xf32, #tpu.memory_space<vmem>>, vector<1x32xf32>
    %25 = vector.broadcast %23 : vector<1x32xf32> to vector<16x32xf32>
    %26 = arith.mulf %22, %25 : vector<16x32xf32>
    %27 = vector.broadcast %24 : vector<1x32xf32> to vector<16x32xf32>
    %28 = arith.addf %26, %27 : vector<16x32xf32>
    %c0_12 = arith.constant 0 : index
    %c0_13 = arith.constant 0 : index
    %29 = vector.load %arg5[%c0_12, %c0_13] : memref<16x32xf32, #tpu.memory_space<vmem>>, vector<16x32xf32>
    tpu.vector_store %arg5[%c0_12, %c0_13], %28 {strides = array<i32>} : memref<16x32xf32, #tpu.memory_space<vmem>>, vector<16x32xf32>,
    return
  }
  func.func @transform_0(%arg0: i32) -> (i32, i32) {
    %c0_i32 = arith.constant 0 : i32
    %c0_i32_0 = arith.constant 0 : i32
    return %arg0, %c0_i32 : i32, i32
  }
  func.func @transform_1(%arg0: i32) -> (i32, i32) {
    %c0_i32 = arith.constant 0 : i32
    %c0_i32_0 = arith.constant 0 : i32
    return %arg0, %c0_i32 : i32, i32
  }
  func.func @transform_2(%arg0: i32) -> (i32, i32) {
    %c0_i32 = arith.constant 0 : i32
    %c0_i32_0 = arith.constant 0 : i32
    %c0_i32_1 = arith.constant 0 : i32
    return %c0_i32, %c0_i32_0 : i32, i32
  }
  func.func @transform_3(%arg0: i32) -> (i32, i32) {
    %c0_i32 = arith.constant 0 : i32
    %c0_i32_0 = arith.constant 0 : i32
    %c0_i32_1 = arith.constant 0 : i32
    return %c0_i32, %c0_i32_0 : i32, i32
  }
  func.func @transform_4(%arg0: i32) -> (i32, i32) {
    %c0_i32 = arith.constant 0 : i32
    %c0_i32_0 = arith.constant 0 : i32
    return %arg0, %c0_i32 : i32, i32
  }
}

</mosaic_0001>

<llo_original>
// kernel: tpu_custom_call.1
$region0: #{tpu_custom_call.1}
  #allocation0 [shape = 'u32[]', space=smem, size = 0x4, offset = 0x4, fixed_abs, tag = 'smem constant byte address 0x4 - core index']
  #allocation1 [shape = 'u32[144,128]{1,0:T(1,128)}', space=vmem, size = 0x12000, scoped, tag = 'internal scratch']
  %s0 = inlined_call_operand.hbm [shape: f32[16,32], index: 0, kind: input, shape index: {}]
  %s1 = inlined_call_operand.hbm [shape: f32[16,32], index: 1, kind: input, shape index: {}]
  %s2 = inlined_call_operand.vmem [shape: f32[1,32], index: 2, kind: input, shape index: {}]
  %s3 = inlined_call_operand.vmem [shape: f32[1,32], index: 3, kind: input, shape index: {}]
  %s4 = inlined_call_operand.hbm [shape: f32[16,32], index: 4, kind: output, shape index: {}]
  %s5 = sld [smem:[#allocation0]]
  $region34: #{tpu_custom_call.1} parent=0
    _
  %s7 = ssub.s32 1, %s5
  %s8 = scalar_select 0, %s7, %s5
  $region1: #{tpu_custom_call.1} parent=0
    #allocation2 [shape = 'u8[8192]{0}', space=vmem, size = 0x2000, scoped, tag = 'input window, operand 0, single buffered']
    #allocation3 [shape = 's32[1]{0}', space=sflag, size = 0x4, scoped, tag = 'scoped memory for tpu_custom_call.1']
    #allocation4 [shape = 's32[1]{0}', space=sflag, size = 0x4, scoped, tag = 'scoped memory for tpu_custom_call.1']
    #allocation5 [shape = 'u8[8192]{0}', space=vmem, size = 0x2000, scoped, tag = 'input window, operand 1, single buffered']
    #allocation6 [shape = 's32[1]{0}', space=sflag, size = 0x4, scoped, tag = 'scoped memory for tpu_custom_call.1']
    #allocation7 [shape = 'u8[8192]{0}', space=vmem, size = 0x2000, scoped, tag = 'output window, operand 0, single buffered']
    %9 = vsyncpa [#allocation3], 0
    %10 = vsyncpa [#allocation6], 0
    %11 = vsyncpa [#allocation4], 0
    // Predicated region
    $region2: #{tpu_custom_call.1} parent=1 // pred_check
      _
    $region3: #{tpu_custom_call.1} parent=1 // pred_check_branch
      %13 = sbr.rel (0) target = $region5
    $region4: #{tpu_custom_call.1} parent=1 // pred_region
      %s15 = ssub.s32 256, 256
      %16 = vsyncadd [#allocation3], %s15
      %s17 = sshll.u32 [#allocation2], 4
      %s18 = int_to_ptr.vmem [resolvable:$true] %s17
      %23 = dma.hbm_to_vmem [thread:$0]  %s0, 256, %s18, [#allocation3], 128, 128, 8
    $region5: #{tpu_custom_call.1} parent=1 // pred_fallthru
      _
    // Predicated region
    $region6: #{tpu_custom_call.1} parent=1 // pred_check
      _
    $region7: #{tpu_custom_call.1} parent=1 // pred_check_branch
      %25 = sbr.rel (0) target = $region9
    $region8: #{tpu_custom_call.1} parent=1 // pred_region
      %s27 = ssub.s32 256, 256
      %28 = vsyncadd [#allocation6], %s27
      %s29 = sshll.u32 [#allocation5], 4
      %s30 = int_to_ptr.vmem [resolvable:$true] %s29
      %35 = dma.hbm_to_vmem [thread:$0]  %s1, 256, %s30, [#allocation6], 128, 128, 8
    $region9: #{tpu_custom_call.1} parent=1 // pred_fallthru
      _
    // Predicated region
    $region10: #{tpu_custom_call.1} parent=1 // pred_check
      _
    $region11: #{tpu_custom_call.1} parent=1 // pred_check_branch
      %37 = sbr.rel (0) target = $region13
    $region12: #{tpu_custom_call.1} parent=1 // pred_region
      _
    $region13: #{tpu_custom_call.1} parent=1 // pred_fallthru
      _
    // Predicated region
    $region14: #{tpu_custom_call.1} parent=1 // pred_check
      _
    $region15: #{tpu_custom_call.1} parent=1 // pred_check_branch
      %39 = sbr.rel (0) target = $region17
    $region16: #{tpu_custom_call.1} parent=1 // pred_region
      _
    $region17: #{tpu_custom_call.1} parent=1 // pred_fallthru
      _
    // Predicated region
    $region18: #{tpu_custom_call.1} parent=1 // pred_check
      _
    $region19: #{tpu_custom_call.1} parent=1 // pred_check_branch
      %41 = sbr.rel (0) target = $region21
    $region20: #{tpu_custom_call.1} parent=1 // pred_region
      %42 = dma.done [#allocation3], 256
    $region21: #{tpu_custom_call.1} parent=1 // pred_fallthru
      _
    // Predicated region
    $region22: #{tpu_custom_call.1} parent=1 // pred_check
      _
    $region23: #{tpu_custom_call.1} parent=1 // pred_check_branch
      %44 = sbr.rel (0) target = $region25
    $region24: #{tpu_custom_call.1} parent=1 // pred_region
      %45 = dma.done [#allocation6], 256
    $region25: #{tpu_custom_call.1} parent=1 // pred_fallthru
      _
    %v46 = vld [vmem:[#allocation2] sm:$0xff]
    %v47 = vld [vmem:[#allocation2 + $0x8] sm:$0xff]
    %v48 = vld [vmem:[#allocation5] sm:$0xff]
    %v49 = vld [vmem:[#allocation5 + $0x8] sm:$0xff]
    %v50 = vadd.f32 %v46, %v48
    %v51 = vadd.f32 %v47, %v49
    %vm52 = vcmask 261120
    %v53 = vsel %vm52, %v50, 0.0
    %54 = vadd.xlane.f32.xlu0 %v53
    %v55 = vpop.xlane.xlu0 %54
    %v56 = vsel %vm52, %v51, 0.0
    %57 = vadd.xlane.f32.xlu0 %v56
    %v58 = vpop.xlane.xlu0 %57
    %v59 = vmul.f32 %v50, %v50
    %v60 = vmul.f32 %v51, %v51
    %v61 = vsel %vm52, %v59, 0.0
    %62 = vadd.xlane.f32.xlu0 %v61
    %v63 = vpop.xlane.xlu0 %62
    %v64 = vsel %vm52, %v60, 0.0
    %65 = vadd.xlane.f32.xlu0 %v64
    %v66 = vpop.xlane.xlu0 %65
    %v67 = vmul.f32 %v55, 0.03125
    %v68 = vmul.f32 %v58, 0.03125
    %v69 = vmul.f32 %v63, 0.03125
    %v70 = vmul.f32 %v66, 0.03125
    %v71 = vmul.f32 %v67, %v67
    %v72 = vmul.f32 %v68, %v68
    %v73 = vsub.f32 %v69, %v71
    %v74 = vsub.f32 %v70, %v72
    %v75 = vmax.f32 %v73, 0.0
    %v76 = vmax.f32 %v74, 0.0
    %v77 = vsub.f32 %v50, %v67
    %v78 = vsub.f32 %v51, %v68
    %v79 = vadd.f32 %v75, 1e-05
    %v80 = vadd.f32 %v76, 1e-05
    %v81 = vrsqrt.pop %v79
    %v82 = vrsqrt.pop %v80
    %v83 = vmul.f32 %v77, %v81
    %v84 = vmul.f32 %v78, %v82
    %v85 = vld [vmem:[%s2] sm:$0x1]
    %v86 = vld [vmem:[%s3] sm:$0x1]
    %v88 = vlaneseq
    %v89 = vshrl.u32 %v88, 7
    %v90 = vsub.s32 0, %v89
    %v91 = vrot.slane %v85, %v90
    %v93 = vmul.f32 %v83, %v91
    %v94 = vmul.f32 %v84, %v91
    %v96 = vlaneseq
    %v97 = vshrl.u32 %v96, 7
    %v98 = vsub.s32 0, %v97
    %v99 = vrot.slane %v86, %v98
    %v101 = vadd.f32 %v93, %v99
    %v102 = vadd.f32 %v94, %v99
    %103 = vst.msk [vmem:[#allocation7] sm:$0xff] %vm52, %v101
    %104 = vst.msk [vmem:[#allocation7 + $0x8] sm:$0xff] %vm52, %v102
    // Predicated region
    $region26: #{tpu_custom_call.1} parent=1 // pred_check
      _
    $region27: #{tpu_custom_call.1} parent=1 // pred_check_branch
      %106 = sbr.rel (0) target = $region29
    $region28: #{tpu_custom_call.1} parent=1 // pred_region
      %s108 = ssub.s32 256, 256
      %109 = vsyncadd [#allocation4], %s108
      %s110 = sshll.u32 [#allocation7], 4
      %s111 = int_to_ptr.vmem [resolvable:$true] %s110
      %116 = dma.vmem_to_hbm [thread:$0]  %s111, 256, %s4, [#allocation4], 128, 128, 8
    $region29: #{tpu_custom_call.1} parent=1 // pred_fallthru
      _
    // Predicated region
    $region30: #{tpu_custom_call.1} parent=1 // pred_check
      _
    $region31: #{tpu_custom_call.1} parent=1 // pred_check_branch
      %118 = sbr.rel (0) target = $region33
    $region32: #{tpu_custom_call.1} parent=1 // pred_region
      %119 = dma.done [#allocation4], 256
    $region33: #{tpu_custom_call.1} parent=1 // pred_fallthru
      _
    %120 = vsyncpa [#allocation3], 1
    %121 = vsyncpa [#allocation6], 1
    %122 = vsyncpa [#allocation4], 1

</llo_original>
